<compile_context>
chip_gen: v5e
topology: v5e:2x2
jax: 0.10.0
libtpu: 0.0.40
codegen_flags: <defaults>
</compile_context>

<pallas_src>
import functools

import jax
import jax.numpy as jnp
from jax.experimental import pallas as pl
from jax.experimental.pallas import tpu as pltpu


def _round_up(x, m):
    return ((x + m - 1) // m) * m


def _plan_edge_tiling(E, H, tile_e):
    """Pick a 128-aligned edge tile and the padded edge count.

    * tile is always a multiple of 128 (lane-dense, valid BlockSpec).
    * Double-buffered streams are budgeted against a conservative VMEM cap so
      large H cannot blow v7x's 64 MiB/TC (32 MiB scoped default).
    * The edge axis is split into >= 2 grid steps whenever E > 128 so the
      "parallel" dimension can shard across v7x's two TensorCores.
    """
    e128 = _round_up(max(E, 1), 128)
    vmem_budget = 24 << 20                       # conservative, fits every gen
    per_edge = 2 * 2 * H * 2 + 2 * 4             # 2 streams x 2 bufs x bf16 + out
    cap = max(128, (vmem_budget // per_edge) // 128 * 128)
    tile_e = max(128, min((max(tile_e, 128) // 128) * 128, cap))
    n_steps = -(-e128 // tile_e)
    if n_steps == 1 and e128 > 128:
        n_steps = 2                              # keep v7x's 2nd core busy
    tile = _round_up(-(-e128 // n_steps), 128)
    e_pad = n_steps * tile
    return tile, e_pad


def _mlp_edge_kernel(xs_ref, xd_ref, a_s_ref, a_d_ref, bw_ref, b2_ref, o_ref):
    # xs_ref/xd_ref  : [H, TE] bf16  endpoint features, edges on lanes (stream)
    # a_s_ref/a_d_ref: [H, H]  bf16  split + transposed W1 (VMEM-resident)
    # bw_ref         : [H, 2]  f32   column 0 = b1, column 1 = w2 (resident)
    # b2_ref         : (1, 1)  f32   scalar in SMEM
    # o_ref          : [1, TE] f32   lane-dense edge scores
    hidden = jnp.dot(a_s_ref[...], xs_ref[...],
                     preferred_element_type=jnp.float32)
    hidden = hidden + jnp.dot(a_d_ref[...], xd_ref[...],
                              preferred_element_type=jnp.float32)
    b1_col = bw_ref[:, 0:1]                         # [H, 1]
    w2_col = bw_ref[:, 1:2]                         # [H, 1]
    hidden = jnp.maximum(hidden + b1_col, 0.0)      # ReLU in f32
    # Second linear (H -> 1): VPU multiply + sublane reduce, not a 1-useful-
    # column MXU pass.
    score = jnp.sum(hidden * w2_col, axis=0, keepdims=True) + b2_ref[0, 0]
    o_ref[...] = score.astype(o_ref.dtype)


@functools.partial(jax.jit, static_argnames=("tile_e",))
def mlp_predictor_forward(h, src, dst, w1, b1, w2, b2, *, tile_e=8192):
    """Edge scores for MLPPredictor.

    h   : [N, H]  node embeddings
    src : [E]     int32 source node index per edge
    dst : [E]     int32 destination node index per edge
    w1  : [2H, H] (pre-transposed nn.Linear(2H, H) weight), b1 : [H]
    w2  : [H, 1]  (pre-transposed nn.Linear(H, 1) weight),  b2 : [1]
    returns: [E] float32 edge scores
    """
    E = src.shape[0]
    N, H = h.shape
    assert N >= 1, "graph must have at least one node"
    if E == 0:
        return jnp.zeros((0,), jnp.float32)

    tile, e_pad = _plan_edge_tiling(E, H, tile_e)

    # Pad only the cheap int32 index vectors (padded edges gather node 0 and
    # are sliced off at the end).
    if e_pad != E:
        src = jnp.pad(src, (0, e_pad - E))
        dst = jnp.pad(dst, (0, e_pad - E))

    # Glue (gather stays in XLA): transpose h once ([N,H] -> [H,N], tiny) and
    # gather along axis=1, so no [E, H] temporary + big transpose per stream.
    # The PyTorch concat is folded into the split W1 below.
    h_bf_t = h.astype(jnp.bfloat16).T            # [H, N]
    xs = jnp.take(h_bf_t, src, axis=1)           # [H, e_pad] bf16
    xd = jnp.take(h_bf_t, dst, axis=1)           # [H, e_pad] bf16

    a_s = w1[:H, :].T.astype(jnp.bfloat16)       # [H, H]
    a_d = w1[H:, :].T.astype(jnp.bfloat16)       # [H, H]
    bw = jnp.concatenate(
        [b1.astype(jnp.float32).reshape(H, 1),
         w2.astype(jnp.float32).reshape(H, 1)], axis=1)   # [H, 2]
    b2_2d = b2.astype(jnp.float32).reshape(1, 1)

    # Explicit VMEM budget: double-buffered streams + output + resident weights.
    stream_bytes = 2 * 2 * H * tile * 2
    out_bytes = 2 * tile * 4
    resident_bytes = 2 * H * H * 2 + H * 2 * 4
    vmem_limit = int(min(max(2 * (stream_bytes + out_bytes + resident_bytes),
                             16 << 20), 48 << 20))

    grid = (e_pad // tile,)
    out = pl.pallas_call(
        _mlp_edge_kernel,
        out_shape=jax.ShapeDtypeStruct((1, e_pad), jnp.float32),
        grid_spec=pltpu.PrefetchScalarGridSpec(
            num_scalar_prefetch=0,
            grid=grid,
            in_specs=[
                pl.BlockSpec((H, tile), lambda i: (0, i)),   # xs tile (stream)
                pl.BlockSpec((H, tile), lambda i: (0, i)),   # xd tile (stream)
                pl.BlockSpec((H, H), lambda i: (0, 0)),      # A_s (resident)
                pl.BlockSpec((H, H), lambda i: (0, 0)),      # A_d (resident)
                pl.BlockSpec((H, 2), lambda i: (0, 0)),      # [b1 | w2]
                pl.BlockSpec(memory_space=pltpu.MemorySpace.SMEM),  # b2 scalar
            ],
            out_specs=pl.BlockSpec((1, tile), lambda i: (0, i)),
        ),
        compiler_params=pltpu.CompilerParams(
            dimension_semantics=("parallel",),
            vmem_limit_bytes=vmem_limit,
        ),
    )(xs, xd, a_s, a_d, bw, b2_2d)

    return out[0, :E]


def init_params(key, h_feats):
    """Deterministic init matching nn.Linear shapes (stored as [in, out])."""
    k1, k2, k3, k4 = jax.random.split(key, 4)
    in1 = 2 * h_feats
    lim1 = 1.0 / jnp.sqrt(in1)
    lim2 = 1.0 / jnp.sqrt(h_feats)
    w1 = jax.random.uniform(k1, (in1, h_feats), jnp.float32, -lim1, lim1)
    b1 = jax.random.uniform(k2, (h_feats,), jnp.float32, -lim1, lim1)
    w2 = jax.random.uniform(k3, (h_feats, 1), jnp.float32, -lim2, lim2)
    b2 = jax.random.uniform(k4, (1,), jnp.float32, -lim2, lim2)
    return w1, b1, w2, b2


if __name__ == "__main__":
    key = jax.random.PRNGKey(0)
    k_h, k_src, k_dst, k_p = jax.random.split(key, 4)

    h_feats = 32
    num_nodes = 16
    num_edges = 256   # synthetic edge list standing in for the DGL graph

    h = jax.random.normal(k_h, (num_nodes, h_feats), jnp.float32)
    src = jax.random.randint(k_src, (num_edges,), 0, num_nodes, jnp.int32)
    dst = jax.random.randint(k_dst, (num_edges,), 0, num_nodes, jnp.int32)

    w1, b1, w2, b2 = init_params(k_p, h_feats)

    scores = mlp_predictor_forward(h, src, dst, w1, b1, w2, b2)
    scores = jax.block_until_ready(scores)
    assert scores.shape == (num_edges,)

    # Reference: same math with the same bf16-quantized streamed operands
    # (the kernel accumulates in f32), evaluated at HIGHEST precision.
    hq = h.astype(jnp.bfloat16).astype(jnp.float32)
    w1q = w1.astype(jnp.bfloat16).astype(jnp.float32)
    x_ref = jnp.concatenate([hq[src], hq[dst]], axis=1)
    h1_ref = jnp.maximum(
        jnp.matmul(x_ref, w1q, precision=jax.lax.Precision.HIGHEST) + b1, 0.0)
    ref = (jnp.matmul(h1_ref, w2, precision=jax.lax.Precision.HIGHEST) + b2)[:, 0]
    assert jnp.allclose(scores, ref, atol=2e-3, rtol=2e-3), float(
        jnp.max(jnp.abs(scores - ref)))

    print("KERNEL_OK")
</pallas_src>

<mosaic_0001>
module attributes {stable_mosaic.version = 11 : i64} {
  func.func @_mlp_edge_kernel(%arg0: i32, %arg1: memref<32x128xbf16, #tpu.memory_space<vmem>>, %arg2: memref<32x128xbf16, #tpu.memory_space<vmem>>, %arg3: memref<32x32xbf16, #tpu.memory_space<vmem>>, %arg4: memref<32x32xbf16, #tpu.memory_space<vmem>>, %arg5: memref<32x2xf32, #tpu.memory_space<vmem>>, %arg6: memref<1x1xf32, #tpu.memory_space<smem>>, %arg7: memref<1x128xf32, #tpu.memory_space<vmem>>) attributes {dimension_semantics = [#tpu.dimension_semantics<parallel>], iteration_bounds = array<i64: 2>, scalar_prefetch = 0 : i64, scratch_operands = 0 : i64, tpu.core_type = #tpu.core_type<tc>, window_params = [{transform_indices = @transform_0, window_bounds = array<i64: 32, 128>}, {transform_indices = @transform_1, window_bounds = array<i64: 32, 128>}, {pipeline_mode = #tpu.pipeline_mode<synchronous>, transform_indices = @transform_2, window_bounds = array<i64: 32, 32>}, {pipeline_mode = #tpu.pipeline_mode<synchronous>, transform_indices = @transform_3, window_bounds = array<i64: 32, 32>}, {pipeline_mode = #tpu.pipeline_mode<synchronous>, transform_indices = @transform_4, window_bounds = array<i64: 32, 2>}, {transform_indices = @transform_5, window_bounds = array<i64: 1, 1>}, {transform_indices = @transform_6, window_bounds = array<i64: 1, 128>}]} {
    %c0 = arith.constant 0 : index
    %c0_0 = arith.constant 0 : index
    %0 = vector.load %arg3[%c0, %c0_0] : memref<32x32xbf16, #tpu.memory_space<vmem>>, vector<32x32xbf16>
    %c0_1 = arith.constant 0 : index
    %c0_2 = arith.constant 0 : index
    %1 = vector.load %arg1[%c0_1, %c0_2] : memref<32x128xbf16, #tpu.memory_space<vmem>>, vector<32x128xbf16>
    %cst = arith.constant dense<0.000000e+00> : vector<32x128xf32>
    %2 = tpu.matmul %0, %1, %cst {dimension_numbers = #tpu.dot_dimension_numbers<[1], [0], [0], [1], [0, 0, 1, 1], [], []>} : vector<32x32xbf16>, vector<32x128xbf16>, vector<32x128xf32> -> vector<32x128xf32>
    %c0_3 = arith.constant 0 : index
    %c0_4 = arith.constant 0 : index
    %3 = vector.load %arg4[%c0_3, %c0_4] : memref<32x32xbf16, #tpu.memory_space<vmem>>, vector<32x32xbf16>
    %c0_5 = arith.constant 0 : index
    %c0_6 = arith.constant 0 : index
    %4 = vector.load %arg2[%c0_5, %c0_6] : memref<32x128xbf16, #tpu.memory_space<vmem>>, vector<32x128xbf16>
    %cst_7 = arith.constant dense<0.000000e+00> : vector<32x128xf32>
    %5 = tpu.matmul %3, %4, %cst_7 {dimension_numbers = #tpu.dot_dimension_numbers<[1], [0], [0], [1], [0, 0, 1, 1], [], []>} : vector<32x32xbf16>, vector<32x128xbf16>, vector<32x128xf32> -> vector<32x128xf32>
    %6 = arith.addf %2, %5 : vector<32x128xf32>
    %c0_8 = arith.constant 0 : index
    %c0_9 = arith.constant 0 : index
    %7 = vector.load %arg5[%c0_8, %c0_9] : memref<32x2xf32, #tpu.memory_space<vmem>>, vector<32x1xf32>
    %c0_10 = arith.constant 0 : index
    %c1 = arith.constant 1 : index
    %8 = vector.load %arg5[%c0_10, %c1] : memref<32x2xf32, #tpu.memory_space<vmem>>, vector<32x1xf32>
    %9 = vector.broadcast %7 : vector<32x1xf32> to vector<32x128xf32>
    %10 = arith.addf %6, %9 : vector<32x128xf32>
    %cst_11 = arith.constant 0.000000e+00 : f32
    %11 = vector.broadcast %cst_11 : f32 to vector<32x128xf32>
    %12 = arith.maximumf %10, %11 : vector<32x128xf32>
    %13 = vector.broadcast %8 : vector<32x1xf32> to vector<32x128xf32>
    %14 = arith.mulf %12, %13 : vector<32x128xf32>
    %cst_12 = arith.constant dense<0.000000e+00> : vector<128xf32>
    %15 = vector.multi_reduction <add>, %14, %cst_12 [0] : vector<32x128xf32> to vector<128xf32>
    %16 = vector.shape_cast %15 : vector<128xf32> to vector<1x128xf32>
    %c0_13 = arith.constant 0 : index
    %c0_14 = arith.constant 0 : index
    %17 = memref.load %arg6[%c0_13, %c0_14] : memref<1x1xf32, #tpu.memory_space<smem>>
    %18 = vector.broadcast %17 : f32 to vector<1x128xf32>
    %19 = arith.addf %16, %18 : vector<1x128xf32>
    %c0_15 = arith.constant 0 : index
    %c0_16 = arith.constant 0 : index
    %20 = vector.load %arg7[%c0_15, %c0_16] : memref<1x128xf32, #tpu.memory_space<vmem>>, vector<1x128xf32>
    tpu.vector_store %arg7[%c0_15, %c0_16], %19 {strides = array<i32>} : memref<1x128xf32, #tpu.memory_space<vmem>>, vector<1x128xf32>,
    return
  }
  func.func @transform_0(%arg0: i32) -> (i32, i32) {
    %c0_i32 = arith.constant 0 : i32
    %c0_i32_0 = arith.constant 0 : i32
    return %c0_i32, %arg0 : i32, i32
  }
  func.func @transform_1(%arg0: i32) -> (i32, i32) {
    %c0_i32 = arith.constant 0 : i32
    %c0_i32_0 = arith.constant 0 : i32
    return %c0_i32, %arg0 : i32, i32
  }
  func.func @transform_2(%arg0: i32) -> (i32, i32) {
    %c0_i32 = arith.constant 0 : i32
    %c0_i32_0 = arith.constant 0 : i32
    %c0_i32_1 = arith.constant 0 : i32
    return %c0_i32, %c0_i32_0 : i32, i32
  }
  func.func @transform_3(%arg0: i32) -> (i32, i32) {
    %c0_i32 = arith.constant 0 : i32
    %c0_i32_0 = arith.constant 0 : i32
    %c0_i32_1 = arith.constant 0 : i32
    return %c0_i32, %c0_i32_0 : i32, i32
  }
  func.func @transform_4(%arg0: i32) -> (i32, i32) {
    %c0_i32 = arith.constant 0 : i32
    %c0_i32_0 = arith.constant 0 : i32
    %c0_i32_1 = arith.constant 0 : i32
    return %c0_i32, %c0_i32_0 : i32, i32
  }
  func.func @transform_5(%arg0: i32) -> (i32, i32) {
    %c0_i32 = arith.constant 0 : i32
    %c0_i32_0 = arith.constant 0 : i32
    %c0_i32_1 = arith.constant 0 : i32
    return %c0_i32, %c0_i32_0 : i32, i32
  }
  func.func @transform_6(%arg0: i32) -> (i32, i32) {
    %c0_i32 = arith.constant 0 : i32
    %c0_i32_0 = arith.constant 0 : i32
    return %c0_i32, %arg0 : i32, i32
  }
}

</mosaic_0001>

<llo_original>
// kernel: mlp_predictor_forward.1
$region0: #{mlp_predictor_forward.1}
  #allocation0 [shape = 'u32[]', space=smem, size = 0x4, offset = 0x4, fixed_abs, tag = 'smem constant byte address 0x4 - core index']
  #allocation1 [shape = 'u32[72,128]{1,0:T(1,128)}', space=vmem, size = 0x9000, scoped, tag = 'internal scratch']
  #allocation2 [shape = 'f32[1,1]{1,0:T(1,128)S(6)}', space=smem, size = 0x200, scoped, tag = 'scoped memory for mlp_predictor_forward.1']
  %s0 = inlined_call_operand.vmem [shape: bf16[32,256], index: 0, kind: input, shape index: {}]
  %s1 = inlined_call_operand.vmem [shape: bf16[32,256], index: 1, kind: input, shape index: {}]
  %s2 = inlined_call_operand.vmem [shape: bf16[32,32], index: 2, kind: input, shape index: {}]
  %s3 = inlined_call_operand.vmem [shape: bf16[32,32], index: 3, kind: input, shape index: {}]
  %s4 = inlined_call_operand.vmem [shape: f32[32,2], index: 4, kind: input, shape index: {}]
  %s5 = inlined_call_operand.<no memory space> [shape: f32[1,1], index: 5, kind: input, shape index: {}]
  %s6 = inlined_call_operand.hbm [shape: f32[1,256], index: 6, kind: output, shape index: {}]
  %s7 = sld [smem:[#allocation0]]
  $region139: #{mlp_predictor_forward.1} parent=0
    _
  %s9 = ssub.s32 1, %s7
  %s10 = scalar_select 0, %s9, %s7
  %11 = sst [smem:[#allocation2]] %s5
  $region1: #{mlp_predictor_forward.1} parent=0
    #allocation3 [shape = 'u8[16384]{0}', space=vmem, size = 0x4000, scoped, tag = 'input window, operand 0']
    #allocation4 [shape = 'u8[16384]{0}', space=vmem, size = 0x4000, scoped, tag = 'input window, operand 1']
    #allocation5 [shape = 'u8[1024]{0}', space=vmem, size = 0x400, scoped, tag = 'output window, operand 0']
    #allocation6 [shape = 's32[2]{0}', space=sflag, size = 0x8, scoped, tag = 'scoped memory for mlp_predictor_forward.1']
    %12 = vsyncpa [#allocation6], 0
    %s13 = scalar_lea.sflag [#allocation6], 1
    %14 = vsyncpa %s13, 0
    loop: start=0, step=1, limit=4
    $region2: #{mlp_predictor_forward.1} parent=1 // loop_pre_header
      _
    $region3: #{mlp_predictor_forward.1} parent=1 // loop_header
      %s16 = sphi 0, %s20
      %p17 = scmp.ge.s32.totalorder %s16, 4
      %s26 = sphi 0, %s28
      %s29 = sphi 0, %s26
      %s30 = sphi 0, %s29
      %s46 = sphi 0, %s30
      %s52 = sphi 0, %s54
      %s55 = sphi 0, %s52
      %s56 = sphi 0, %s55
      %s72 = sphi 0, %s56
      %s76 = sphi 0, %s76
      %s78 = sphi 0, %s76
      %s79 = sphi 0, %s78
      %s93 = sphi 0, %s79
      %s97 = sphi 0, %s97
      %s99 = sphi 0, %s97
      %s100 = sphi 0, %s99
      %s114 = sphi 0, %s100
      %s118 = sphi 0, %s118
      %s120 = sphi 0, %s118
      %s121 = sphi 0, %s120
      %s135 = sphi 0, %s121
      %s139 = sphi 0, %s139
      %s141 = sphi 0, %s139
      %s142 = sphi 0, %s141
      %s156 = sphi 0, %s142
      %s162 = sphi 0, %s164
      %s165 = sphi 0, %s162
      %s166 = sphi 0, %s165
      %s182 = sphi 0, %s166
    $region4: #{mlp_predictor_forward.1} parent=1 // loop_header_branch
      %19 = sbr.rel (%p17) target = $region8
    $region5: #{mlp_predictor_forward.1} parent=1 // loop_body
      %s21 = ssub.s32 %s16, 1
      %s22 = ssub.s32 %s16, 2
      %s23 = sadd.s32 %s16, 1
      %s24 = ssub.s32 %s16, %s23
      %p25 = scmp.eq.s32.totalorder %s24, 0
      %s27 = sadd.s32 %s26, 1
      %s28 = scalar_select %p25, %s26, %s27
      %p31 = pneg %p25
      %p32 = scmp.eq.s32.totalorder %s16, 1
      %p33 = por %p31, %p32
      %p34 = scmp.ne.s32.totalorder %s26, %s29
      %p35 = scmp.eq.s32.totalorder %s16, 0
      %p36 = por %p34, %p35
      %p37 = scmp.ne.s32.totalorder %s26, %s29
      %p38 = scmp.eq.s32.totalorder %s21, 1
      %p39 = por %p37, %p38
      %p40 = scmp.ne.s32.totalorder %s29, %s30
      %p41 = scmp.eq.s32.totalorder %s21, 0
      %p42 = por %p40, %p41
      %p43 = scmp.ne.s32.totalorder %s29, %s30
      %p44 = scmp.eq.s32.totalorder %s22, 1
      %p45 = por %p43, %p44
      %p47 = scmp.ne.s32.totalorder %s30, %s46
      %p48 = scmp.eq.s32.totalorder %s22, 0
      %p49 = por %p47, %p48
      %s50 = ssub.s32 %s16, %s23
      %p51 = scmp.eq.s32.totalorder %s50, 0
      %s53 = sadd.s32 %s52, 1
      %s54 = scalar_select %p51, %s52, %s53
      %p57 = pneg %p51
      %p58 = scmp.eq.s32.totalorder %s16, 1
      %p59 = por %p57, %p58
      %p60 = scmp.ne.s32.totalorder %s52, %s55
      %p61 = scmp.eq.s32.totalorder %s16, 0
      %p62 = por %p60, %p61
      %p63 = scmp.ne.s32.totalorder %s52, %s55
      %p64 = scmp.eq.s32.totalorder %s21, 1
      %p65 = por %p63, %p64
      %p66 = scmp.ne.s32.totalorder %s55, %s56
      %p67 = scmp.eq.s32.totalorder %s21, 0
      %p68 = por %p66, %p67
      %p69 = scmp.ne.s32.totalorder %s55, %s56
      %p70 = scmp.eq.s32.totalorder %s22, 1
      %p71 = por %p69, %p70
      %p73 = scmp.ne.s32.totalorder %s56, %s72
      %p74 = scmp.eq.s32.totalorder %s22, 0
      %p75 = por %p73, %p74
      %s77 = sadd.s32 %s76, 1
      %p80 = scmp.eq.s32.totalorder %s16, 1
      %p81 = scmp.ne.s32.totalorder %s76, %s78
      %p82 = scmp.eq.s32.totalorder %s16, 0
      %p83 = por %p81, %p82
      %p84 = scmp.ne.s32.totalorder %s76, %s78
      %p85 = scmp.eq.s32.totalorder %s21, 1
      %p86 = por %p84, %p85
      %p87 = scmp.ne.s32.totalorder %s78, %s79
      %p88 = scmp.eq.s32.totalorder %s21, 0
      %p89 = por %p87, %p88
      %p90 = scmp.ne.s32.totalorder %s78, %s79
      %p91 = scmp.eq.s32.totalorder %s22, 1
      %p92 = por %p90, %p91
      %p94 = scmp.ne.s32.totalorder %s79, %s93
      %p95 = scmp.eq.s32.totalorder %s22, 0
      %p96 = por %p94, %p95
      %s98 = sadd.s32 %s97, 1
      %p101 = scmp.eq.s32.totalorder %s16, 1
      %p102 = scmp.ne.s32.totalorder %s97, %s99
      %p103 = scmp.eq.s32.totalorder %s16, 0
      %p104 = por %p102, %p103
      %p105 = scmp.ne.s32.totalorder %s97, %s99
      %p106 = scmp.eq.s32.totalorder %s21, 1
      %p107 = por %p105, %p106
      %p108 = scmp.ne.s32.totalorder %s99, %s100
      %p109 = scmp.eq.s32.totalorder %s21, 0
      %p110 = por %p108, %p109
      %p111 = scmp.ne.s32.totalorder %s99, %s100
      %p112 = scmp.eq.s32.totalorder %s22, 1
      %p113 = por %p111, %p112
      %p115 = scmp.ne.s32.totalorder %s100, %s114
      %p116 = scmp.eq.s32.totalorder %s22, 0
      %p117 = por %p115, %p116
      %s119 = sadd.s32 %s118, 1
      %p122 = scmp.eq.s32.totalorder %s16, 1
      %p123 = scmp.ne.s32.totalorder %s118, %s120
      %p124 = scmp.eq.s32.totalorder %s16, 0
      %p125 = por %p123, %p124
      %p126 = scmp.ne.s32.totalorder %s118, %s120
      %p127 = scmp.eq.s32.totalorder %s21, 1
      %p128 = por %p126, %p127
      %p129 = scmp.ne.s32.totalorder %s120, %s121
      %p130 = scmp.eq.s32.totalorder %s21, 0
      %p131 = por %p129, %p130
      %p132 = scmp.ne.s32.totalorder %s120, %s121
      %p133 = scmp.eq.s32.totalorder %s22, 1
      %p134 = por %p132, %p133
      %p136 = scmp.ne.s32.totalorder %s121, %s135
      %p137 = scmp.eq.s32.totalorder %s22, 0
      %p138 = por %p136, %p137
      %s140 = sadd.s32 %s139, 1
      %p143 = scmp.eq.s32.totalorder %s16, 1
      %p144 = scmp.ne.s32.totalorder %s139, %s141
      %p145 = scmp.eq.s32.totalorder %s16, 0
      %p146 = por %p144, %p145
      %p147 = scmp.ne.s32.totalorder %s139, %s141
      %p148 = scmp.eq.s32.totalorder %s21, 1
      %p149 = por %p147, %p148
      %p150 = scmp.ne.s32.totalorder %s141, %s142
      %p151 = scmp.eq.s32.totalorder %s21, 0
      %p152 = por %p150, %p151
      %p153 = scmp.ne.s32.totalorder %s141, %s142
      %p154 = scmp.eq.s32.totalorder %s22, 1
      %p155 = por %p153, %p154
      %p157 = scmp.ne.s32.totalorder %s142, %s156
      %p158 = scmp.eq.s32.totalorder %s22, 0
      %p159 = por %p157, %p158
      %s160 = ssub.s32 %s16, %s23
      %p161 = scmp.eq.s32.totalorder %s160, 0
      %s163 = sadd.s32 %s162, 1
      %s164 = scalar_select %p161, %s162, %s163
      %p167 = pneg %p161
      %p168 = scmp.eq.s32.totalorder %s16, 1
      %p169 = por %p167, %p168
      %p170 = scmp.ne.s32.totalorder %s162, %s165
      %p171 = scmp.eq.s32.totalorder %s16, 0
      %p172 = por %p170, %p171
      %p173 = scmp.ne.s32.totalorder %s162, %s165
      %p174 = scmp.eq.s32.totalorder %s21, 1
      %p175 = por %p173, %p174
      %p176 = scmp.ne.s32.totalorder %s165, %s166
      %p177 = scmp.eq.s32.totalorder %s21, 0
      %p178 = por %p176, %p177
      %p179 = scmp.ne.s32.totalorder %s165, %s166
      %p180 = scmp.eq.s32.totalorder %s22, 1
      %p181 = por %p179, %p180
      %p183 = scmp.ne.s32.totalorder %s166, %s182
      %p184 = scmp.eq.s32.totalorder %s22, 0
      %p185 = por %p183, %p184
      %p186 = scmp.le.s32.totalorder 1, %s16
      %p187 = scmp.lt.s32.totalorder %s16, 3
      %p188 = pnand %p186, %p187
      %p189 = pneg %p188
      // Predicated region
      $region9: #{mlp_predictor_forward.1} parent=5 // pred_check
        _
      $region10: #{mlp_predictor_forward.1} parent=5 // pred_check_branch
        %191 = sbr.rel (%p188) target = $region12
      $region11: #{mlp_predictor_forward.1} parent=5 // pred_region
        %s192 = ssub.s32 %s16, 1
        // Predicated region
        $region13: #{mlp_predictor_forward.1} parent=11 // pred_check
          %p193 = pneg %p89
        $region14: #{mlp_predictor_forward.1} parent=11 // pred_check_branch
          %195 = sbr.rel (%p193) target = $region16
        $region15: #{mlp_predictor_forward.1} parent=11 // pred_region
          _
        $region16: #{mlp_predictor_forward.1} parent=11 // pred_fallthru
          _
        // Predicated region
        $region17: #{mlp_predictor_forward.1} parent=11 // pred_check
          %p196 = pneg %p110
        $region18: #{mlp_predictor_forward.1} parent=11 // pred_check_branch
          %198 = sbr.rel (%p196) target = $region20
        $region19: #{mlp_predictor_forward.1} parent=11 // pred_region
          _
        $region20: #{mlp_predictor_forward.1} parent=11 // pred_fallthru
          _
        // Predicated region
        $region21: #{mlp_predictor_forward.1} parent=11 // pred_check
          %p199 = pneg %p131
        $region22: #{mlp_predictor_forward.1} parent=11 // pred_check_branch
          %201 = sbr.rel (%p199) target = $region24
        $region23: #{mlp_predictor_forward.1} parent=11 // pred_region
          _
        $region24: #{mlp_predictor_forward.1} parent=11 // pred_fallthru
          _
        // Predicated region
        $region25: #{mlp_predictor_forward.1} parent=11 // pred_check
          %p202 = pneg %p152
        $region26: #{mlp_predictor_forward.1} parent=11 // pred_check_branch
          %204 = sbr.rel (%p202) target = $region28
        $region27: #{mlp_predictor_forward.1} parent=11 // pred_region
          _
        $region28: #{mlp_predictor_forward.1} parent=11 // pred_fallthru
          _
      $region12: #{mlp_predictor_forward.1} parent=5 // pred_fallthru
        _
      %p205 = scmp.lt.s32.totalorder %s16, 2
      // Predicated region
      $region29: #{mlp_predictor_forward.1} parent=5 // pred_check
        %p206 = pneg %p205
      $region30: #{mlp_predictor_forward.1} parent=5 // pred_check_branch
        %208 = sbr.rel (%p206) target = $region32
      $region31: #{mlp_predictor_forward.1} parent=5 // pred_region
        // Predicated region
        $region33: #{mlp_predictor_forward.1} parent=31 // pred_check
          %p209 = pneg %p36
        $region34: #{mlp_predictor_forward.1} parent=31 // pred_check_branch
          %211 = sbr.rel (%p209) target = $region36
        $region35: #{mlp_predictor_forward.1} parent=31 // pred_region
          %s212 = sand.u32 %s26, 1
          %s213 = sand.u32 %s26, 1
          %s214 = smul.addr %s213, 16
          %s215 = scalar_lea.vmem [#allocation3], %s214
          %s216 = smul.addr %s16, 4
          %s217 = scalar_lea.vmem %s0, %s216
          // Predicated region
          $region37: #{mlp_predictor_forward.1} parent=35 // pred_check
            _
          $region38: #{mlp_predictor_forward.1} parent=35 // pred_check_branch
            %219 = sbr.rel (0) target = $region40
          $region39: #{mlp_predictor_forward.1} parent=35 // pred_region
            // Predicated region
            $region41: #{mlp_predictor_forward.1} parent=39 // pred_check
              _
            $region42: #{mlp_predictor_forward.1} parent=39 // pred_check_branch
              %221 = sbr.rel target = $region44
            $region43: #{mlp_predictor_forward.1} parent=39 // pred_region
              // Predicated region
              $region56: #{mlp_predictor_forward.1} parent=43 // pred_check
                _
              $region57: #{mlp_predictor_forward.1} parent=43 // pred_check_branch
                %243 = sbr.rel (0) target = $region59
              $region58: #{mlp_predictor_forward.1} parent=43 // pred_region
                loop: start=0, step=1, limit=1
                $region60: #{mlp_predictor_forward.1} parent=58 // loop_pre_header
                  _
                $region61: #{mlp_predictor_forward.1} parent=58 // loop_header
                  %s245 = sphi 0, %s249
                  %p246 = scmp.ge.s32.totalorder %s245, 1
                  %s250 = sphi %s217, %s217
                  %s251 = sphi %s215, %s215
                $region62: #{mlp_predictor_forward.1} parent=58 // loop_header_branch
                  %248 = sbr.rel (%p246) target = $region66
                $region63: #{mlp_predictor_forward.1} parent=58 // loop_body
                  _
                $region64: #{mlp_predictor_forward.1} parent=58 // loop_footer
                  %s249 = sadd.s32 1, %s245
                $region65: #{mlp_predictor_forward.1} parent=58 // loop_footer_branch
                  %244 = sbr.rel target = $region61
                $region66: #{mlp_predictor_forward.1} parent=58 // loop_exit
                  _
                %s253 = ssub.s32 16, 1
                loop: start=0, step=1, limit=1
                $region67: #{mlp_predictor_forward.1} parent=58 // loop_pre_header
                  _
                $region68: #{mlp_predictor_forward.1} parent=58 // loop_header
                  %s255 = sphi 0, %s259
                  %p256 = scmp.ge.s32.totalorder %s255, 1
                  %s260 = sphi %s217, %s217
                  %s261 = sphi %s215, %s215
                $region69: #{mlp_predictor_forward.1} parent=58 // loop_header_branch
                  %258 = sbr.rel (%p256) target = $region73
                $region70: #{mlp_predictor_forward.1} parent=58 // loop_body
                  %v262 = vld [vmem:[%s260] sm:%s253]
                  %263 = vst [vmem:[%s261] sm:%s253] %v262
                  %v264 = vld [vmem:[%s260 + $0x8] sm:%s253]
                  %265 = vst [vmem:[%s261 + $0x4] sm:%s253] %v264
                  %v266 = vld [vmem:[%s260 + $0x10] sm:%s253]
                  %267 = vst [vmem:[%s261 + $0x8] sm:%s253] %v266
                  %v268 = vld [vmem:[%s260 + $0x18] sm:%s253]
                  %269 = vst [vmem:[%s261 + $0xc] sm:%s253] %v268
                $region71: #{mlp_predictor_forward.1} parent=58 // loop_footer
                  %s259 = sadd.s32 1, %s255
                $region72: #{mlp_predictor_forward.1} parent=58 // loop_footer_branch
                  %254 = sbr.rel target = $region68
                $region73: #{mlp_predictor_forward.1} parent=58 // loop_exit
                  _
              $region59: #{mlp_predictor_forward.1} parent=43 // pred_fallthru
                _
            $region44: #{mlp_predictor_forward.1} parent=39 // pred_fallthru
              _
            // Predicated region
            $region45: #{mlp_predictor_forward.1} parent=39 // pred_check
              _
            $region46: #{mlp_predictor_forward.1} parent=39 // pred_check_branch
              %223 = sbr.rel (0) target = $region48
            $region47: #{mlp_predictor_forward.1} parent=39 // pred_region
              %s225 = ssub.s32 16, 1
              loop: start=0, step=1, limit=1
              $region49: #{mlp_predictor_forward.1} parent=47 // loop_pre_header
                _
              $region50: #{mlp_predictor_forward.1} parent=47 // loop_header
                %s227 = sphi 0, %s231
                %p228 = scmp.ge.s32.totalorder %s227, 1
                %s232 = sphi %s217, %s217
                %s233 = sphi %s215, %s215
              $region51: #{mlp_predictor_forward.1} parent=47 // loop_header_branch
                %230 = sbr.rel (%p228) target = $region55
              $region52: #{mlp_predictor_forward.1} parent=47 // loop_body
                %v234 = vld [vmem:[%s232] sm:%s225]
                %235 = vst [vmem:[%s233] sm:%s225] %v234
                %v236 = vld [vmem:[%s232 + $0x8] sm:%s225]
                %237 = vst [vmem:[%s233 + $0x4] sm:%s225] %v236
                %v238 = vld [vmem:[%s232 + $0x10] sm:%s225]
                %239 = vst [vmem:[%s233 + $0x8] sm:%s225] %v238
                %v240 = vld [vmem:[%s232 + $0x18] sm:%s225]
                %241 = vst [vmem:[%s233 + $0xc] sm:%s225] %v240
              $region53: #{mlp_predictor_forward.1} parent=47 // loop_footer
                %s231 = sadd.s32 1, %s227
              $region54: #{mlp_predictor_forward.1} parent=47 // loop_footer_branch
                %226 = sbr.rel target = $region50
              $region55: #{mlp_predictor_forward.1} parent=47 // loop_exit
                _
            $region48: #{mlp_predictor_forward.1} parent=39 // pred_fallthru
              _
          $region40: #{mlp_predictor_forward.1} parent=35 // pred_fallthru
            _
          %270 = vnop
        $region36: #{mlp_predictor_forward.1} parent=31 // pred_fallthru
          _
        // Predicated region
        $region74: #{mlp_predictor_forward.1} parent=31 // pred_check
          %p271 = pneg %p62
        $region75: #{mlp_predictor_forward.1} parent=31 // pred_check_branch
          %273 = sbr.rel (%p271) target = $region77
        $region76: #{mlp_predictor_forward.1} parent=31 // pred_region
          %s274 = sand.u32 %s52, 1
          %s275 = sand.u32 %s52, 1
          %s276 = smul.addr %s275, 16
          %s277 = scalar_lea.vmem [#allocation4], %s276
          %s278 = smul.addr %s16, 4
          %s279 = scalar_lea.vmem %s1, %s278
          // Predicated region
          $region78: #{mlp_predictor_forward.1} parent=76 // pred_check
            _
          $region79: #{mlp_predictor_forward.1} parent=76 // pred_check_branch
            %281 = sbr.rel (0) target = $region81
          $region80: #{mlp_predictor_forward.1} parent=76 // pred_region
            // Predicated region
            $region82: #{mlp_predictor_forward.1} parent=80 // pred_check
              _
            $region83: #{mlp_predictor_forward.1} parent=80 // pred_check_branch
              %283 = sbr.rel target = $region85
            $region84: #{mlp_predictor_forward.1} parent=80 // pred_region
              // Predicated region
              $region97: #{mlp_predictor_forward.1} parent=84 // pred_check
                _
              $region98: #{mlp_predictor_forward.1} parent=84 // pred_check_branch
                %305 = sbr.rel (0) target = $region100
              $region99: #{mlp_predictor_forward.1} parent=84 // pred_region
                loop: start=0, step=1, limit=1
                $region101: #{mlp_predictor_forward.1} parent=99 // loop_pre_header
                  _
                $region102: #{mlp_predictor_forward.1} parent=99 // loop_header
                  %s307 = sphi 0, %s311
                  %p308 = scmp.ge.s32.totalorder %s307, 1
                  %s312 = sphi %s279, %s279
                  %s313 = sphi %s277, %s277
                $region103: #{mlp_predictor_forward.1} parent=99 // loop_header_branch
                  %310 = sbr.rel (%p308) target = $region107
                $region104: #{mlp_predictor_forward.1} parent=99 // loop_body
                  _
                $region105: #{mlp_predictor_forward.1} parent=99 // loop_footer
                  %s311 = sadd.s32 1, %s307
                $region106: #{mlp_predictor_forward.1} parent=99 // loop_footer_branch
                  %306 = sbr.rel target = $region102
                $region107: #{mlp_predictor_forward.1} parent=99 // loop_exit
                  _
                %s315 = ssub.s32 16, 1
                loop: start=0, step=1, limit=1
                $region108: #{mlp_predictor_forward.1} parent=99 // loop_pre_header
                  _
                $region109: #{mlp_predictor_forward.1} parent=99 // loop_header
                  %s317 = sphi 0, %s321
                  %p318 = scmp.ge.s32.totalorder %s317, 1
                  %s322 = sphi %s279, %s279
                  %s323 = sphi %s277, %s277
                $region110: #{mlp_predictor_forward.1} parent=99 // loop_header_branch
                  %320 = sbr.rel (%p318) target = $region114
                $region111: #{mlp_predictor_forward.1} parent=99 // loop_body
                  %v324 = vld [vmem:[%s322] sm:%s315]
                  %325 = vst [vmem:[%s323] sm:%s315] %v324
                  %v326 = vld [vmem:[%s322 + $0x8] sm:%s315]
                  %327 = vst [vmem:[%s323 + $0x4] sm:%s315] %v326
                  %v328 = vld [vmem:[%s322 + $0x10] sm:%s315]
                  %329 = vst [vmem:[%s323 + $0x8] sm:%s315] %v328
                  %v330 = vld [vmem:[%s322 + $0x18] sm:%s315]
                  %331 = vst [vmem:[%s323 + $0xc] sm:%s315] %v330
                $region112: #{mlp_predictor_forward.1} parent=99 // loop_footer
                  %s321 = sadd.s32 1, %s317
                $region113: #{mlp_predictor_forward.1} parent=99 // loop_footer_branch
                  %316 = sbr.rel target = $region109
                $region114: #{mlp_predictor_forward.1} parent=99 // loop_exit
                  _
              $region100: #{mlp_predictor_forward.1} parent=84 // pred_fallthru
                _
            $region85: #{mlp_predictor_forward.1} parent=80 // pred_fallthru
              _
            // Predicated region
            $region86: #{mlp_predictor_forward.1} parent=80 // pred_check
              _
            $region87: #{mlp_predictor_forward.1} parent=80 // pred_check_branch
              %285 = sbr.rel (0) target = $region89
            $region88: #{mlp_predictor_forward.1} parent=80 // pred_region
              %s287 = ssub.s32 16, 1
              loop: start=0, step=1, limit=1
              $region90: #{mlp_predictor_forward.1} parent=88 // loop_pre_header
                _
              $region91: #{mlp_predictor_forward.1} parent=88 // loop_header
                %s289 = sphi 0, %s293
                %p290 = scmp.ge.s32.totalorder %s289, 1
                %s294 = sphi %s279, %s279
                %s295 = sphi %s277, %s277
              $region92: #{mlp_predictor_forward.1} parent=88 // loop_header_branch
                %292 = sbr.rel (%p290) target = $region96
              $region93: #{mlp_predictor_forward.1} parent=88 // loop_body
                %v296 = vld [vmem:[%s294] sm:%s287]
                %297 = vst [vmem:[%s295] sm:%s287] %v296
                %v298 = vld [vmem:[%s294 + $0x8] sm:%s287]
                %299 = vst [vmem:[%s295 + $0x4] sm:%s287] %v298
                %v300 = vld [vmem:[%s294 + $0x10] sm:%s287]
                %301 = vst [vmem:[%s295 + $0x8] sm:%s287] %v300
                %v302 = vld [vmem:[%s294 + $0x18] sm:%s287]
                %303 = vst [vmem:[%s295 + $0xc] sm:%s287] %v302
              $region94: #{mlp_predictor_forward.1} parent=88 // loop_footer
                %s293 = sadd.s32 1, %s289
              $region95: #{mlp_predictor_forward.1} parent=88 // loop_footer_branch
                %288 = sbr.rel target = $region91
              $region96: #{mlp_predictor_forward.1} parent=88 // loop_exit
                _
            $region89: #{mlp_predictor_forward.1} parent=80 // pred_fallthru
              _
          $region81: #{mlp_predictor_forward.1} parent=76 // pred_fallthru
            _
          %332 = vnop
        $region77: #{mlp_predictor_forward.1} parent=31 // pred_fallthru
          _
      $region32: #{mlp_predictor_forward.1} parent=5 // pred_fallthru
        _
      %p333 = scmp.le.s32.totalorder 1, %s16
      %p334 = scmp.lt.s32.totalorder %s16, 3
      %p335 = pnand %p333, %p334
      %p336 = pneg %p335
      // Predicated region
      $region115: #{mlp_predictor_forward.1} parent=5 // pred_check
        _
      $region116: #{mlp_predictor_forward.1} parent=5 // pred_check_branch
        %338 = sbr.rel (%p335) target = $region118
      $region117: #{mlp_predictor_forward.1} parent=5 // pred_region
        %s339 = ssub.s32 %s16, 1
        %s340 = sand.u32 %s29, 1
        %s341 = sand.u32 %s29, 1
        %s342 = smul.addr %s341, 16
        %s343 = scalar_lea.vmem [#allocation3], %s342
        // Predicated region
        $region119: #{mlp_predictor_forward.1} parent=117 // pred_check
          %p344 = pneg %p42
        $region120: #{mlp_predictor_forward.1} parent=117 // pred_check_branch
          %346 = sbr.rel (%p344) target = $region122
        $region121: #{mlp_predictor_forward.1} parent=117 // pred_region
          _
        $region122: #{mlp_predictor_forward.1} parent=117 // pred_fallthru
          _
        %s347 = sand.u32 %s55, 1
        %s348 = sand.u32 %s55, 1
        %s349 = smul.addr %s348, 16
        %s350 = scalar_lea.vmem [#allocation4], %s349
        // Predicated region
        $region123: #{mlp_predictor_forward.1} parent=117 // pred_check
          %p351 = pneg %p68
        $region124: #{mlp_predictor_forward.1} parent=117 // pred_check_branch
          %353 = sbr.rel (%p351) target = $region126
        $region125: #{mlp_predictor_forward.1} parent=117 // pred_region
          _
        $region126: #{mlp_predictor_forward.1} parent=117 // pred_fallthru
          _
        %s354 = sand.u32 %s29, 1
        %s355 = sand.u32 %s29, 1
        %s356 = smul.addr %s355, 16
        %s357 = scalar_lea.vmem [#allocation3], %s356
        %p358 = pneg %p42
        %p359 = pneg %p39
        %s360 = sand.u32 %s55, 1
        %s361 = sand.u32 %s55, 1
        %s362 = smul.addr %s361, 16
        %s363 = scalar_lea.vmem [#allocation4], %s362
        %p364 = pneg %p68
        %p365 = pneg %p65
        %p366 = pneg %p89
        %p367 = pneg %p86
        %p368 = pneg %p110
        %p369 = pneg %p107
        %p370 = pneg %p131
        %p371 = pneg %p128
        %p372 = pneg %p152
        %p373 = pneg %p149
        %p374 = pneg %p178
        %p375 = pneg %p175
        %s376 = sand.u32 %s165, 1
        %s377 = scalar_lea.sflag [#allocation6], %s376
        %s378 = sand.u32 %s165, 1
        %s379 = scalar_lea.vmem [#allocation5], %s378
        %v381 = vld [vmem:[%s2] sm:$0xf]
        %v382 = vld [vmem:[%s2 + $0x4] sm:$0xf]
        %v383 = vld [vmem:[%s2 + $0x8] sm:$0xf]
        %v384 = vld [vmem:[%s2 + $0xc] sm:$0xf]
        %v385 = vld [vmem:[%s343] sm:$0xf]
        %v386 = vld [vmem:[%s343 + $0x4] sm:$0xf]
        %v387 = vld [vmem:[%s343 + $0x8] sm:$0xf]
        %v388 = vld [vmem:[%s343 + $0xc] sm:$0xf]
        %v389 = vld [vmem:[%s3] sm:$0xf]
        %v390 = vld [vmem:[%s3 + $0x4] sm:$0xf]
        %v391 = vld [vmem:[%s3 + $0x8] sm:$0xf]
        %v392 = vld [vmem:[%s3 + $0xc] sm:$0xf]
        %v393 = vld [vmem:[%s350] sm:$0xf]
        %v394 = vld [vmem:[%s350 + $0x4] sm:$0xf]
        %v395 = vld [vmem:[%s350 + $0x8] sm:$0xf]
        %v396 = vld [vmem:[%s350 + $0xc] sm:$0xf]
        %v401 = vunpack.c.l.b16 %v389
        %v402 = vunpack.c.l.b16 %v390
        %v403 = vunpack.c.l.b16 %v391
        %v404 = vunpack.c.l.b16 %v392
        %v405 = vpack.c.b16 %v402, %v401
        %v406 = vpack.c.b16 %v404, %v403
        %v411 = vunpack.c.l.b16 %v393
        %v412 = vunpack.c.l.b16 %v394
        %v413 = vunpack.c.l.b16 %v395
        %v414 = vunpack.c.l.b16 %v396
        %v415 = vpack.c.b16 %v412, %v411
        %v416 = vpack.c.b16 %v414, %v413
        %vm419 = vcmask 261120
        %v421 = vsel %vm419, %v405, 0
        %v424 = vsel %vm419, %v406, 0
        %426 = vmatpush.bf16.msra.mxu0 0
        %427 = vmatpush.bf16.msra.mxu0 0
        %428 = vmatpush.bf16.msra.mxu0 0
        %429 = vmatpush.bf16.msra.mxu0 0
        %430 = vmatpush.bf16.msra.mxu0 0
        %431 = vmatpush.bf16.msra.mxu0 0
        %432 = vmatpush.bf16.msra.mxu0 %v416
        %433 = vmatpush.bf16.msra.mxu0 %v415
        %434 = vmatmul.bf16.gmra.mxu0 %v421
        %v435 = vpop.f32.mrf.mxu0
        %v436 = vadd.f32 0.0, %v435
        %v437 = vpop.f32.mrf.mxu0
        %v438 = vadd.f32 0.0, %v437
        %439 = vmatmul.bf16.gmra.mxu0 %v424
        %v440 = vpop.f32.mrf.mxu0
        %v441 = vadd.f32 0.0, %v440
        %v442 = vpop.f32.mrf.mxu0
        %v443 = vadd.f32 0.0, %v442
        %444 = vdwg.mxu0
        %v449 = vunpack.c.l.b16 %v381
        %v450 = vunpack.c.l.b16 %v382
        %v451 = vunpack.c.l.b16 %v383
        %v452 = vunpack.c.l.b16 %v384
        %v453 = vpack.c.b16 %v450, %v449
        %v454 = vpack.c.b16 %v452, %v451
        %v459 = vunpack.c.l.b16 %v385
        %v460 = vunpack.c.l.b16 %v386
        %v461 = vunpack.c.l.b16 %v387
        %v462 = vunpack.c.l.b16 %v388
        %v463 = vpack.c.b16 %v460, %v459
        %v464 = vpack.c.b16 %v462, %v461
        %v468 = vsel %vm419, %v453, 0
        %v471 = vsel %vm419, %v454, 0
        %473 = vmatpush.bf16.msra.mxu0 0
        %474 = vmatpush.bf16.msra.mxu0 0
        %475 = vmatpush.bf16.msra.mxu0 0
        %476 = vmatpush.bf16.msra.mxu0 0
        %477 = vmatpush.bf16.msra.mxu0 0
        %478 = vmatpush.bf16.msra.mxu0 0
        %479 = vmatpush.bf16.msra.mxu0 %v464
        %480 = vmatpush.bf16.msra.mxu0 %v463
        %481 = vmatmul.bf16.gmra.mxu0 %v468
        %v482 = vpop.f32.mrf.mxu0
        %v483 = vadd.f32 %v436, %v482
        %v484 = vpop.f32.mrf.mxu0
        %v485 = vadd.f32 %v438, %v484
        %486 = vmatmul.bf16.gmra.mxu0 %v471
        %v487 = vpop.f32.mrf.mxu0
        %v488 = vadd.f32 %v441, %v487
        %v489 = vpop.f32.mrf.mxu0
        %v490 = vadd.f32 %v443, %v489
        %491 = vdwg.mxu0
        %v492 = vld [vmem:[%s4] sm:$0xff]
        %v493 = vld [vmem:[%s4 + $0x8] sm:$0xff]
        %v494 = vld [vmem:[%s4 + $0x10] sm:$0xff]
        %v495 = vld [vmem:[%s4 + $0x18] sm:$0xff]
        %497 = vset.pattern.permute.xlu0 0
        %498 = vperm.xlu0 %497, %v492
        %v499 = vpop.permute.xlu0 %498
        %502 = vset.pattern.permute.xlu0 0
        %503 = vperm.xlu0 %502, %v493
        %v504 = vpop.permute.xlu0 %503
        %507 = vset.pattern.permute.xlu0 0
        %508 = vperm.xlu0 %507, %v494
        %v509 = vpop.permute.xlu0 %508
        %512 = vset.pattern.permute.xlu0 0
        %513 = vperm.xlu0 %512, %v495
        %v514 = vpop.permute.xlu0 %513
        %v516 = vadd.f32 %v483, %v499
        %v517 = vadd.f32 %v485, %v504
        %v518 = vadd.f32 %v488, %v509
        %v519 = vadd.f32 %v490, %v514
        %v520 = vmax.f32 %v516, 0.0
        %v521 = vmax.f32 %v517, 0.0
        %v522 = vmax.f32 %v518, 0.0
        %v523 = vmax.f32 %v519, 0.0
        %524 = vset.pattern.permute.xlu0 1
        %525 = vperm.xlu0 %524, %v492
        %v526 = vpop.permute.xlu0 %525
        %528 = vset.pattern.permute.xlu0 1
        %529 = vperm.xlu0 %528, %v493
        %v530 = vpop.permute.xlu0 %529
        %532 = vset.pattern.permute.xlu0 1
        %533 = vperm.xlu0 %532, %v494
        %v534 = vpop.permute.xlu0 %533
        %536 = vset.pattern.permute.xlu0 1
        %537 = vperm.xlu0 %536, %v495
        %v538 = vpop.permute.xlu0 %537
        %v540 = vmul.f32 %v520, %v526
        %v541 = vmul.f32 %v521, %v530
        %v542 = vmul.f32 %v522, %v534
        %v543 = vmul.f32 %v523, %v538
        %v544 = vadd.f32 %v540, %v541
        %v545 = vadd.f32 %v544, %v542
        %v546 = vadd.f32 %v545, %v543
        %v547 = vrot.slane %v546, 4
        %v548 = vadd.f32 %v546, %v547
        %v549 = vrot.slane %v548, 2
        %v550 = vadd.f32 %v548, %v549
        %v551 = vrot.slane %v550, 1
        %v552 = vadd.f32 %v550, %v551
        %s553 = sld [smem:[#allocation2]]
        %v554 = vstv %s553
        %v555 = vadd.f32 %v552, %v554
        %556 = vst [vmem:[%s379] sm:$0x1] %v555
        %s557 = sand.u32 %s165, 1
        %s558 = scalar_lea.sflag [#allocation6], %s557
        %s559 = sand.u32 %s165, 1
        %s560 = scalar_lea.vmem [#allocation5], %s559
        // Predicated region
        $region127: #{mlp_predictor_forward.1} parent=117 // pred_check
          %p561 = pneg %p175
        $region128: #{mlp_predictor_forward.1} parent=117 // pred_check_branch
          %563 = sbr.rel (%p561) target = $region130
        $region129: #{mlp_predictor_forward.1} parent=117 // pred_region
          %565 = vsyncadd %s558, 0
          %s566 = scalar_lea.hbm %s6, %s21
          %s568 = sshll.u32 %s560, 4
          %s569 = int_to_ptr.vmem [resolvable:$true] %s568
          %s570 = sshll.u32 %s566, 4
          %s571 = int_to_ptr.hbm [resolvable:$true] %s570
          %573 = dma.vmem_to_hbm [thread:$0]  %s569, 16, %s571, %s558
        $region130: #{mlp_predictor_forward.1} parent=117 // pred_fallthru
          _
      $region118: #{mlp_predictor_forward.1} parent=5 // pred_fallthru
        _
      %p574 = scmp.le.s32.totalorder 2, %s16
      // Predicated region
      $region131: #{mlp_predictor_forward.1} parent=5 // pred_check
        %p575 = pneg %p574
      $region132: #{mlp_predictor_forward.1} parent=5 // pred_check_branch
        %577 = sbr.rel (%p575) target = $region134
      $region133: #{mlp_predictor_forward.1} parent=5 // pred_region
        %s578 = ssub.s32 %s16, 2
        // Predicated region
        $region135: #{mlp_predictor_forward.1} parent=133 // pred_check
          %p579 = pneg %p181
        $region136: #{mlp_predictor_forward.1} parent=133 // pred_check_branch
          %581 = sbr.rel (%p579) target = $region138
        $region137: #{mlp_predictor_forward.1} parent=133 // pred_region
          %s582 = sand.u32 %s166, 1
          %s583 = scalar_lea.sflag [#allocation6], %s582
          %s584 = sand.u32 %s166, 1
          %s585 = scalar_lea.vmem [#allocation5], %s584
          %587 = dma.done %s583, 16
        $region138: #{mlp_predictor_forward.1} parent=133 // pred_fallthru
          _
      $region134: #{mlp_predictor_forward.1} parent=5 // pred_fallthru
        _
    $region6: #{mlp_predictor_forward.1} parent=1 // loop_footer
      %s20 = sadd.s32 1, %s16
    $region7: #{mlp_predictor_forward.1} parent=1 // loop_footer_branch
      %15 = sbr.rel target = $region3
    $region8: #{mlp_predictor_forward.1} parent=1 // loop_exit
      _
    %588 = vsyncpa [#allocation6], 1
    %s589 = scalar_lea.sflag [#allocation6], 1
    %590 = vsyncpa %s589, 1

</llo_original>
